<compile_context>
chip_gen: v7x
topology: tpu7x:2x2x1
jax: 0.10.0
libtpu: 0.0.40
codegen_flags: <defaults>
</compile_context>

<pallas_src>
import jax
import jax.numpy as jnp
from jax.experimental import pallas as pl
from jax.experimental.pallas import tpu as pltpu

LANES = 128
# ~22 B/elem * 128 lanes * 2 buffers ~= 5.6 KiB per row -> 2048 rows ~= 11.5 MiB
# steady-state VMEM: safe under v7x's 64 MiB (and the 32 MiB scoped default).
MAX_TILE_ROWS = 2048


def _eltwise_kernel(x_ref, add_ref, sub_ref, mul_ref, div_ref, gt_ref, lt_ref):
    x = x_ref[...]
    add_ref[...] = x + 10.0
    sub_ref[...] = x - 5.0
    mul_ref[...] = x * 2.0
    div_ref[...] = x / 3.0
    gt_ref[...] = x > 5.0
    lt_ref[...] = x < 2.0


def pt_module_forward(input_tensor):
    """Pallas implementation of PtModule.forward.

    Returns (add, sub, mul, div, greater_than, less_than) with the same
    shapes as the input; comparisons are bool, arithmetic keeps input dtype.
    """
    orig_shape = input_tensor.shape
    dtype = input_tensor.dtype
    total = input_tensor.size

    rows = -(-total // LANES)
    pad = rows * LANES - total

    flat = jnp.reshape(input_tensor, (-1,))
    if pad:
        # Rare path (total % 128 != 0): pad so we can form a lane-dense slab.
        flat = jnp.concatenate([flat, jnp.zeros((pad,), dtype=dtype)])
    x2d = jnp.reshape(flat, (rows, LANES))

    # Tile rows: use the full extent when it fits (single block, still fine),
    # otherwise 2048-row tiles (divisible by 8; Pallas masks a partial tail).
    tile_r = rows if rows <= MAX_TILE_ROWS else MAX_TILE_ROWS
    grid = (pl.cdiv(rows, tile_r),)

    spec = pl.BlockSpec((tile_r, LANES), lambda i: (i, 0))

    out_shapes = (
        jax.ShapeDtypeStruct((rows, LANES), dtype),       # add
        jax.ShapeDtypeStruct((rows, LANES), dtype),       # sub
        jax.ShapeDtypeStruct((rows, LANES), dtype),       # mul
        jax.ShapeDtypeStruct((rows, LANES), dtype),       # div
        jax.ShapeDtypeStruct((rows, LANES), jnp.bool_),   # gt
        jax.ShapeDtypeStruct((rows, LANES), jnp.bool_),   # lt
    )

    n_elem = rows * LANES
    cost = pl.CostEstimate(
        flops=6 * n_elem,            # 6 trivial elementwise ops per element
        transcendentals=0,
        bytes_accessed=22 * n_elem,  # 4B read + 4*4B f32 + 2*1B bool writes
    )

    outs = pl.pallas_call(
        _eltwise_kernel,
        out_shape=out_shapes,
        grid=grid,
        in_specs=[spec],
        out_specs=tuple(spec for _ in out_shapes),
        compiler_params=pltpu.CompilerParams(
            dimension_semantics=("parallel",),
        ),
        cost_estimate=cost,
    )(x2d)

    def _unflatten(a):
        if pad:
            a = jnp.reshape(a, (-1,))[:total]
        return jnp.reshape(a, orig_shape)

    return tuple(_unflatten(o) for o in outs)


if __name__ == "__main__":
    key = jax.random.PRNGKey(0)
    # Small NCHW input consistent with the module (elementwise; any shape works).
    x = jax.random.normal(key, (2, 4, 16, 16), dtype=jnp.float32) * 5.0

    add_r, sub_r, mul_r, div_r, gt_r, lt_r = pt_module_forward(x)
    jax.block_until_ready((add_r, sub_r, mul_r, div_r, gt_r, lt_r))

    # Reference check against plain JAX (same semantics as the PyTorch module).
    assert jnp.allclose(add_r, x + 10)
    assert jnp.allclose(sub_r, x - 5)
    assert jnp.allclose(mul_r, x * 2)
    assert jnp.allclose(div_r, x / 3.0)
    assert jnp.array_equal(gt_r, x > 5)
    assert jnp.array_equal(lt_r, x < 2)
    assert gt_r.dtype == jnp.bool_ and lt_r.dtype == jnp.bool_
    assert add_r.shape == x.shape and gt_r.shape == x.shape

    print("KERNEL_OK")
</pallas_src>

<mosaic_0001>
module attributes {stable_mosaic.version = 11 : i64} {
  func.func @_eltwise_kernel(%arg0: i32, %arg1: memref<16x128xf32, #tpu.memory_space<vmem>>, %arg2: memref<16x128xf32, #tpu.memory_space<vmem>>, %arg3: memref<16x128xf32, #tpu.memory_space<vmem>>, %arg4: memref<16x128xf32, #tpu.memory_space<vmem>>, %arg5: memref<16x128xf32, #tpu.memory_space<vmem>>, %arg6: memref<16x128xi32, #tpu.memory_space<vmem>>, %arg7: memref<16x128xi32, #tpu.memory_space<vmem>>) attributes {dimension_semantics = [#tpu.dimension_semantics<parallel>], iteration_bounds = array<i64: 1>, scalar_prefetch = 0 : i64, scratch_operands = 0 : i64, tpu.core_type = #tpu.core_type<tc>, window_params = [{transform_indices = @transform_0, window_bounds = array<i64: 16, 128>}, {transform_indices = @transform_1, window_bounds = array<i64: 16, 128>}, {transform_indices = @transform_2, window_bounds = array<i64: 16, 128>}, {transform_indices = @transform_3, window_bounds = array<i64: 16, 128>}, {transform_indices = @transform_4, window_bounds = array<i64: 16, 128>}, {transform_indices = @transform_5, window_bounds = array<i64: 16, 128>}, {transform_indices = @transform_6, window_bounds = array<i64: 16, 128>}]} {
    %c0 = arith.constant 0 : index
    %c0_0 = arith.constant 0 : index
    %0 = vector.load %arg1[%c0, %c0_0] : memref<16x128xf32, #tpu.memory_space<vmem>>, vector<16x128xf32>
    %cst = arith.constant 1.000000e+01 : f32
    %1 = vector.broadcast %cst : f32 to vector<16x128xf32>
    %2 = arith.addf %0, %1 : vector<16x128xf32>
    %c0_1 = arith.constant 0 : index
    %c0_2 = arith.constant 0 : index
    %3 = vector.load %arg2[%c0_1, %c0_2] : memref<16x128xf32, #tpu.memory_space<vmem>>, vector<16x128xf32>
    tpu.vector_store %arg2[%c0_1, %c0_2], %2 {strides = array<i32>} : memref<16x128xf32, #tpu.memory_space<vmem>>, vector<16x128xf32>,
    %cst_3 = arith.constant 5.000000e+00 : f32
    %4 = vector.broadcast %cst_3 : f32 to vector<16x128xf32>
    %5 = arith.subf %0, %4 : vector<16x128xf32>
    %c0_4 = arith.constant 0 : index
    %c0_5 = arith.constant 0 : index
    %6 = vector.load %arg3[%c0_4, %c0_5] : memref<16x128xf32, #tpu.memory_space<vmem>>, vector<16x128xf32>
    tpu.vector_store %arg3[%c0_4, %c0_5], %5 {strides = array<i32>} : memref<16x128xf32, #tpu.memory_space<vmem>>, vector<16x128xf32>,
    %cst_6 = arith.constant 2.000000e+00 : f32
    %7 = vector.broadcast %cst_6 : f32 to vector<16x128xf32>
    %8 = arith.mulf %0, %7 : vector<16x128xf32>
    %c0_7 = arith.constant 0 : index
    %c0_8 = arith.constant 0 : index
    %9 = vector.load %arg4[%c0_7, %c0_8] : memref<16x128xf32, #tpu.memory_space<vmem>>, vector<16x128xf32>
    tpu.vector_store %arg4[%c0_7, %c0_8], %8 {strides = array<i32>} : memref<16x128xf32, #tpu.memory_space<vmem>>, vector<16x128xf32>,
    %cst_9 = arith.constant 3.000000e+00 : f32
    %10 = vector.broadcast %cst_9 : f32 to vector<16x128xf32>
    %11 = arith.divf %0, %10 : vector<16x128xf32>
    %c0_10 = arith.constant 0 : index
    %c0_11 = arith.constant 0 : index
    %12 = vector.load %arg5[%c0_10, %c0_11] : memref<16x128xf32, #tpu.memory_space<vmem>>, vector<16x128xf32>
    tpu.vector_store %arg5[%c0_10, %c0_11], %11 {strides = array<i32>} : memref<16x128xf32, #tpu.memory_space<vmem>>, vector<16x128xf32>,
    %cst_12 = arith.constant 5.000000e+00 : f32
    %13 = vector.broadcast %cst_12 : f32 to vector<16x128xf32>
    %14 = arith.cmpf ogt, %0, %13 : vector<16x128xf32>
    %c0_13 = arith.constant 0 : index
    %c0_14 = arith.constant 0 : index
    %15 = vector.load %arg6[%c0_13, %c0_14] : memref<16x128xi32, #tpu.memory_space<vmem>>, vector<16x128xi32>
    %16 = arith.extui %14 : vector<16x128xi1> to vector<16x128xi32>
    %cst_15 = arith.constant dense<0> : vector<16x128xi32>
    %17 = arith.cmpi ne, %15, %cst_15 : vector<16x128xi32>
    tpu.vector_store %arg6[%c0_13, %c0_14], %16 {strides = array<i32>} : memref<16x128xi32, #tpu.memory_space<vmem>>, vector<16x128xi32>,
    %cst_16 = arith.constant 2.000000e+00 : f32
    %18 = vector.broadcast %cst_16 : f32 to vector<16x128xf32>
    %19 = arith.cmpf olt, %0, %18 : vector<16x128xf32>
    %c0_17 = arith.constant 0 : index
    %c0_18 = arith.constant 0 : index
    %20 = vector.load %arg7[%c0_17, %c0_18] : memref<16x128xi32, #tpu.memory_space<vmem>>, vector<16x128xi32>
    %21 = arith.extui %19 : vector<16x128xi1> to vector<16x128xi32>
    %cst_19 = arith.constant dense<0> : vector<16x128xi32>
    %22 = arith.cmpi ne, %20, %cst_19 : vector<16x128xi32>
    tpu.vector_store %arg7[%c0_17, %c0_18], %21 {strides = array<i32>} : memref<16x128xi32, #tpu.memory_space<vmem>>, vector<16x128xi32>,
    return
  }
  func.func @transform_0(%arg0: i32) -> (i32, i32) {
    %c0_i32 = arith.constant 0 : i32
    %c0_i32_0 = arith.constant 0 : i32
    return %arg0, %c0_i32 : i32, i32
  }
  func.func @transform_1(%arg0: i32) -> (i32, i32) {
    %c0_i32 = arith.constant 0 : i32
    %c0_i32_0 = arith.constant 0 : i32
    return %arg0, %c0_i32 : i32, i32
  }
  func.func @transform_2(%arg0: i32) -> (i32, i32) {
    %c0_i32 = arith.constant 0 : i32
    %c0_i32_0 = arith.constant 0 : i32
    return %arg0, %c0_i32 : i32, i32
  }
  func.func @transform_3(%arg0: i32) -> (i32, i32) {
    %c0_i32 = arith.constant 0 : i32
    %c0_i32_0 = arith.constant 0 : i32
    return %arg0, %c0_i32 : i32, i32
  }
  func.func @transform_4(%arg0: i32) -> (i32, i32) {
    %c0_i32 = arith.constant 0 : i32
    %c0_i32_0 = arith.constant 0 : i32
    return %arg0, %c0_i32 : i32, i32
  }
  func.func @transform_5(%arg0: i32) -> (i32, i32) {
    %c0_i32 = arith.constant 0 : i32
    %c0_i32_0 = arith.constant 0 : i32
    return %arg0, %c0_i32 : i32, i32
  }
  func.func @transform_6(%arg0: i32) -> (i32, i32) {
    %c0_i32 = arith.constant 0 : i32
    %c0_i32_0 = arith.constant 0 : i32
    return %arg0, %c0_i32 : i32, i32
  }
}

</mosaic_0001>

<llo_original>
// kernel: tpu_custom_call.1
$region0: #{tpu_custom_call.1}
  #allocation0 [shape = 'u32[]', space=smem, size = 0x4, offset = 0x4, fixed_abs, tag = 'smem constant byte address 0x4 - core index']
  #allocation1 [shape = 'u32[144,128]{1,0:T(1,128)}', space=vmem, size = 0x12000, scoped, tag = 'internal scratch']
  %s0 = inlined_call_operand.hbm [shape: f32[16,128], index: 0, kind: input, shape index: {}]
  %s1 = inlined_call_operand.hbm [shape: f32[16,128], index: 1, kind: output, shape index: {0}]
  %s2 = inlined_call_operand.hbm [shape: f32[16,128], index: 2, kind: output, shape index: {1}]
  %s3 = inlined_call_operand.hbm [shape: f32[16,128], index: 3, kind: output, shape index: {2}]
  %s4 = inlined_call_operand.hbm [shape: f32[16,128], index: 4, kind: output, shape index: {3}]
  %s5 = inlined_call_operand.vmem [shape: s32[16,128], index: 5, kind: output, shape index: {4}]
  %s6 = inlined_call_operand.vmem [shape: s32[16,128], index: 6, kind: output, shape index: {5}]
  %7 = xla_tuple %s1, %s2, %s3, %s4, %s5, %s6
  %s8 = sld [smem:[#allocation0]]
  $region58: #{tpu_custom_call.1} parent=0
    _
  %s10 = ssub.s32 1, %s8
  %s11 = scalar_select 0, %s10, %s8
  $region1: #{tpu_custom_call.1} parent=0
    #allocation2 [shape = 'u8[8192]{0}', space=vmem, size = 0x2000, scoped, tag = 'input window, operand 0, single buffered']
    #allocation3 [shape = 's32[1]{0}', space=sflag, size = 0x4, scoped, tag = 'scoped memory for tpu_custom_call.1']
    #allocation4 [shape = 's32[1]{0}', space=sflag, size = 0x4, scoped, tag = 'scoped memory for tpu_custom_call.1']
    #allocation5 [shape = 'u8[8192]{0}', space=vmem, size = 0x2000, scoped, tag = 'output window, operand 0, single buffered']
    #allocation6 [shape = 'u8[8192]{0}', space=vmem, size = 0x2000, scoped, tag = 'output window, operand 1, single buffered']
    #allocation7 [shape = 's32[1]{0}', space=sflag, size = 0x4, scoped, tag = 'scoped memory for tpu_custom_call.1']
    #allocation8 [shape = 'u8[8192]{0}', space=vmem, size = 0x2000, scoped, tag = 'output window, operand 2, single buffered']
    #allocation9 [shape = 'u8[8192]{0}', space=vmem, size = 0x2000, scoped, tag = 'output window, operand 3, single buffered']
    #allocation10 [shape = 's32[1]{0}', space=sflag, size = 0x4, scoped, tag = 'scoped memory for tpu_custom_call.1']
    %12 = vsyncpa [#allocation3], 0
    %13 = vsyncpa [#allocation4], 0
    %14 = vsyncpa [#allocation7], 0
    %15 = vsyncpa [#allocation10], 0
    // Predicated region
    $region2: #{tpu_custom_call.1} parent=1 // pred_check
      _
    $region3: #{tpu_custom_call.1} parent=1 // pred_check_branch
      %17 = sbr.rel (0) target = $region5
    $region4: #{tpu_custom_call.1} parent=1 // pred_region
      %s19 = ssub.s32 256, 256
      %20 = vsyncadd [#allocation3], %s19
      %s21 = sshll.u32 [#allocation2], 4
      %s22 = int_to_ptr.vmem [resolvable:$true] %s21
      %27 = dma.hbm_to_vmem [thread:$0]  %s0, 256, %s22, [#allocation3], 128, 128, 8
    $region5: #{tpu_custom_call.1} parent=1 // pred_fallthru
      _
    // Predicated region
    $region6: #{tpu_custom_call.1} parent=1 // pred_check
      _
    $region7: #{tpu_custom_call.1} parent=1 // pred_check_branch
      %29 = sbr.rel (0) target = $region9
    $region8: #{tpu_custom_call.1} parent=1 // pred_region
      %30 = dma.done [#allocation3], 256
    $region9: #{tpu_custom_call.1} parent=1 // pred_fallthru
      _
    %v31 = vld [vmem:[#allocation2] sm:$0xff]
    %v32 = vld [vmem:[#allocation2 + $0x8] sm:$0xff]
    %v33 = vadd.f32 %v31, 10.0
    %v34 = vadd.f32 %v32, 10.0
    %35 = vst [vmem:[#allocation5] sm:$0xff] %v33
    %36 = vst [vmem:[#allocation5 + $0x8] sm:$0xff] %v34
    %v37 = vsub.f32 %v31, 5.0
    %v38 = vsub.f32 %v32, 5.0
    %39 = vst [vmem:[#allocation6] sm:$0xff] %v37
    %40 = vst [vmem:[#allocation6 + $0x8] sm:$0xff] %v38
    %v41 = vmul.f32 %v31, 2.0
    %v42 = vmul.f32 %v32, 2.0
    %43 = vst [vmem:[#allocation8] sm:$0xff] %v41
    %44 = vst [vmem:[#allocation8 + $0x8] sm:$0xff] %v42
    %v45 = vrcp.pop 3.0
    %v46 = vmul.f32 %v31, %v45
    %v47 = vmul.f32 %v32, %v45
    %48 = vst [vmem:[#allocation9] sm:$0xff] %v46
    %49 = vst [vmem:[#allocation9 + $0x8] sm:$0xff] %v47
    %vm50 = vcmp.gt.f32.partialorder %v31, 5.0
    %vm51 = vcmp.gt.f32.partialorder %v32, 5.0
    %v52 = vsel %vm50, 1, 0
    %v53 = vsel %vm51, 1, 0
    %54 = vst [vmem:[%s5] sm:$0xff] %v52
    %55 = vst [vmem:[%s5 + $0x8] sm:$0xff] %v53
    %vm56 = vcmp.lt.f32.partialorder %v31, 2.0
    %vm57 = vcmp.lt.f32.partialorder %v32, 2.0
    %v58 = vsel %vm56, 1, 0
    %v59 = vsel %vm57, 1, 0
    %60 = vst [vmem:[%s6] sm:$0xff] %v58
    %61 = vst [vmem:[%s6 + $0x8] sm:$0xff] %v59
    // Predicated region
    $region10: #{tpu_custom_call.1} parent=1 // pred_check
      _
    $region11: #{tpu_custom_call.1} parent=1 // pred_check_branch
      %63 = sbr.rel (0) target = $region13
    $region12: #{tpu_custom_call.1} parent=1 // pred_region
      %s65 = ssub.s32 256, 256
      %66 = vsyncadd [#allocation4], %s65
      %s67 = sshll.u32 [#allocation5], 4
      %s68 = int_to_ptr.vmem [resolvable:$true] %s67
      %73 = dma.vmem_to_hbm [thread:$0]  %s68, 256, %s1, [#allocation4], 128, 128, 8
    $region13: #{tpu_custom_call.1} parent=1 // pred_fallthru
      _
    // Predicated region
    $region14: #{tpu_custom_call.1} parent=1 // pred_check
      _
    $region15: #{tpu_custom_call.1} parent=1 // pred_check_branch
      %75 = sbr.rel (0) target = $region17
    $region16: #{tpu_custom_call.1} parent=1 // pred_region
      %s77 = ssub.s32 256, 256
      %78 = vsyncadd [#allocation7], %s77
      %s79 = sshll.u32 [#allocation6], 4
      %s80 = int_to_ptr.vmem [resolvable:$true] %s79
      %85 = dma.vmem_to_hbm [thread:$0]  %s80, 256, %s2, [#allocation7], 128, 128, 8
    $region17: #{tpu_custom_call.1} parent=1 // pred_fallthru
      _
    // Predicated region
    $region18: #{tpu_custom_call.1} parent=1 // pred_check
      _
    $region19: #{tpu_custom_call.1} parent=1 // pred_check_branch
      %87 = sbr.rel (0) target = $region21
    $region20: #{tpu_custom_call.1} parent=1 // pred_region
      %s89 = ssub.s32 256, 256
      %90 = vsyncadd [#allocation7], %s89
      %s91 = sshll.u32 [#allocation8], 4
      %s92 = int_to_ptr.vmem [resolvable:$true] %s91
      %97 = dma.vmem_to_hbm [thread:$0]  %s92, 256, %s3, [#allocation7], 128, 128, 8
    $region21: #{tpu_custom_call.1} parent=1 // pred_fallthru
      _
    // Predicated region
    $region22: #{tpu_custom_call.1} parent=1 // pred_check
      _
    $region23: #{tpu_custom_call.1} parent=1 // pred_check_branch
      %99 = sbr.rel (0) target = $region25
    $region24: #{tpu_custom_call.1} parent=1 // pred_region
      %s101 = ssub.s32 256, 256
      %102 = vsyncadd [#allocation10], %s101
      %s103 = sshll.u32 [#allocation9], 4
      %s104 = int_to_ptr.vmem [resolvable:$true] %s103
      %109 = dma.vmem_to_hbm [thread:$0]  %s104, 256, %s4, [#allocation10], 128, 128, 8
    $region25: #{tpu_custom_call.1} parent=1 // pred_fallthru
      _
    // Predicated region
    $region26: #{tpu_custom_call.1} parent=1 // pred_check
      _
    $region27: #{tpu_custom_call.1} parent=1 // pred_check_branch
      %111 = sbr.rel (0) target = $region29
    $region28: #{tpu_custom_call.1} parent=1 // pred_region
      _
    $region29: #{tpu_custom_call.1} parent=1 // pred_fallthru
      _
    // Predicated region
    $region30: #{tpu_custom_call.1} parent=1 // pred_check
      _
    $region31: #{tpu_custom_call.1} parent=1 // pred_check_branch
      %113 = sbr.rel (0) target = $region33
    $region32: #{tpu_custom_call.1} parent=1 // pred_region
      _
    $region33: #{tpu_custom_call.1} parent=1 // pred_fallthru
      _
    // Predicated region
    $region34: #{tpu_custom_call.1} parent=1 // pred_check
      _
    $region35: #{tpu_custom_call.1} parent=1 // pred_check_branch
      %115 = sbr.rel (0) target = $region37
    $region36: #{tpu_custom_call.1} parent=1 // pred_region
      %116 = dma.done [#allocation4], 256
    $region37: #{tpu_custom_call.1} parent=1 // pred_fallthru
      _
    // Predicated region
    $region38: #{tpu_custom_call.1} parent=1 // pred_check
      _
    $region39: #{tpu_custom_call.1} parent=1 // pred_check_branch
      %118 = sbr.rel (0) target = $region41
    $region40: #{tpu_custom_call.1} parent=1 // pred_region
      %119 = dma.done [#allocation7], 256
    $region41: #{tpu_custom_call.1} parent=1 // pred_fallthru
      _
    // Predicated region
    $region42: #{tpu_custom_call.1} parent=1 // pred_check
      _
    $region43: #{tpu_custom_call.1} parent=1 // pred_check_branch
      %121 = sbr.rel (0) target = $region45
    $region44: #{tpu_custom_call.1} parent=1 // pred_region
      %122 = dma.done [#allocation7], 256
    $region45: #{tpu_custom_call.1} parent=1 // pred_fallthru
      _
    // Predicated region
    $region46: #{tpu_custom_call.1} parent=1 // pred_check
      _
    $region47: #{tpu_custom_call.1} parent=1 // pred_check_branch
      %124 = sbr.rel (0) target = $region49
    $region48: #{tpu_custom_call.1} parent=1 // pred_region
      %125 = dma.done [#allocation10], 256
    $region49: #{tpu_custom_call.1} parent=1 // pred_fallthru
      _
    // Predicated region
    $region50: #{tpu_custom_call.1} parent=1 // pred_check
      _
    $region51: #{tpu_custom_call.1} parent=1 // pred_check_branch
      %127 = sbr.rel (0) target = $region53
    $region52: #{tpu_custom_call.1} parent=1 // pred_region
      _
    $region53: #{tpu_custom_call.1} parent=1 // pred_fallthru
      _
    // Predicated region
    $region54: #{tpu_custom_call.1} parent=1 // pred_check
      _
    $region55: #{tpu_custom_call.1} parent=1 // pred_check_branch
      %129 = sbr.rel (0) target = $region57
    $region56: #{tpu_custom_call.1} parent=1 // pred_region
      _
    $region57: #{tpu_custom_call.1} parent=1 // pred_fallthru
      _
    %130 = vsyncpa [#allocation3], 1
    %131 = vsyncpa [#allocation4], 1
    %132 = vsyncpa [#allocation7], 1
    %133 = vsyncpa [#allocation10], 1

</llo_original>
